<compile_context>
chip_gen: v7x
topology: tpu7x:2x2x1
jax: 0.10.0
libtpu: 0.0.40
codegen_flags: <defaults>
</compile_context>

<pallas_src>
import jax
import jax.numpy as jnp
from jax.experimental import pallas as pl
from jax.experimental.pallas import tpu as pltpu


def _round_up(n, m):
    return ((n + m - 1) // m) * m


def rnn_cell_kernel(x_ref, h_ref, wih_ref, whh_ref, b_ref, out_ref):
    # x_ref  : (B, I)   f32 input activations (cast to bf16 here, on the VPU)
    # h_ref  : (B, H)   f32 hidden state
    # wih_ref: (I, HT)  bf16 column tile of W_ih^T
    # whh_ref: (H, HT)  bf16 column tile of W_hh^T
    # b_ref  : (1, HT)  f32 pre-summed bias tile (b_ih + b_hh)
    # out_ref: (B, HT)  f32 output tile
    xb = x_ref[...].astype(jnp.bfloat16)
    hb = h_ref[...].astype(jnp.bfloat16)
    acc = jnp.dot(xb, wih_ref[...], preferred_element_type=jnp.float32)
    acc = acc + jnp.dot(hb, whh_ref[...], preferred_element_type=jnp.float32)
    out_ref[...] = jnp.tanh(acc + b_ref[...]).astype(out_ref.dtype)


def prepare_rnn_params(w_ih, b_ih, w_hh, b_hh):
    """One-time parameter preparation (do this OUTSIDE any step loop).

    w_ih: (H, I), w_hh: (H, H) in PyTorch nn.Linear layout; biases: (H,).
    Returns bf16 transposed weights padded to Hp = ceil128(H) output columns
    and the pre-summed f32 bias (1, Hp).  Padded columns are zero, so the
    corresponding outputs are tanh(0) = 0 and are sliced off by the wrapper.
    """
    H, _I = w_ih.shape
    assert w_hh.shape == (H, H) and b_ih.shape == (H,) and b_hh.shape == (H,)
    Hp = _round_up(H, 128)
    wih_t = jnp.pad(w_ih.T, ((0, 0), (0, Hp - H))).astype(jnp.bfloat16)   # (I, Hp)
    whh_t = jnp.pad(w_hh.T, ((0, 0), (0, Hp - H))).astype(jnp.bfloat16)   # (H, Hp)
    b_fused = jnp.pad((b_ih + b_hh).reshape(1, H).astype(jnp.float32),
                      ((0, 0), (0, Hp - H)))                              # (1, Hp)
    return wih_t, whh_t, b_fused


def _choose_col_tile(Hp, K_total):
    """Widest 128-multiple output-column tile whose double-buffered bf16
    weight blocks stay well inside the smallest default scoped VMEM."""
    budget = 12 << 20   # conservative vs. v5e's 16 MiB default scoped VMEM
    for ht in (Hp, 1024, 512, 256, 128):
        if ht <= Hp and Hp % ht == 0 and 2 * K_total * ht * 2 <= budget:
            return ht
    return 128
    # TODO(synk): for very large H on v7x also tile K with a reduction grid
    # axis + f32 VMEM accumulator (pl.when init/finalize) so the weight tile
    # is bounded in K as well.


def rnn_manual_forward(x, h, wih_t, whh_t, b_fused):
    """x: (B, input_size), h: (B, hidden_size) -> (B, hidden_size)."""
    B, I = x.shape
    Bh, H = h.shape
    Iw, Hp = wih_t.shape
    assert Bh == B and Iw == I and whh_t.shape == (H, Hp) and b_fused.shape == (1, Hp)

    HT = _choose_col_tile(Hp, I + H)
    n_tiles = Hp // HT

    # Grid-invariant activation blocks only need a single VMEM buffer when
    # the grid actually has multiple steps (only weight tiles change per step).
    inv = dict(pipeline_mode=pl.Buffered(1)) if n_tiles > 1 else {}

    compiler_kwargs = dict(dimension_semantics=("parallel",))
    need = (2 * (I + H) * HT * 2       # double-buffered bf16 weight tiles
            + B * (I + H) * 4          # activations (single-buffered)
            + 2 * (B + 1) * HT * 4)    # output + bias tiles
    if need > (12 << 20):
        # Raise scoped VMEM only when the tile footprint needs it (headroom kept).
        compiler_kwargs["vmem_limit_bytes"] = min(int(need * 2) + (8 << 20), 120 << 20)

    out_padded = pl.pallas_call(
        rnn_cell_kernel,
        out_shape=jax.ShapeDtypeStruct((B, Hp), x.dtype),
        grid_spec=pltpu.PrefetchScalarGridSpec(
            num_scalar_prefetch=0,
            grid=(n_tiles,),
            in_specs=[
                pl.BlockSpec((B, I), lambda j: (0, 0), **inv),   # x  (reused)
                pl.BlockSpec((B, H), lambda j: (0, 0), **inv),   # h  (reused)
                pl.BlockSpec((I, HT), lambda j: (0, j)),          # W_ih^T tile
                pl.BlockSpec((H, HT), lambda j: (0, j)),          # W_hh^T tile
                pl.BlockSpec((1, HT), lambda j: (0, j)),          # bias tile
            ],
            out_specs=pl.BlockSpec((B, HT), lambda j: (0, j)),
        ),
        compiler_params=pltpu.CompilerParams(**compiler_kwargs),
    )(x, h, wih_t, whh_t, b_fused)

    return out_padded if Hp == H else out_padded[:, :H]


if __name__ == "__main__":
    # Small shapes consistent with the module: one RNN-cell step.
    batch = 2
    input_size = 16
    hidden_size = 32

    key = jax.random.PRNGKey(0)
    kx, kh, kw1, kb1, kw2, kb2 = jax.random.split(key, 6)

    x = jax.random.normal(kx, (batch, input_size), dtype=jnp.float32)
    h = jax.random.normal(kh, (batch, hidden_size), dtype=jnp.float32)

    # Deterministic parameter init (PyTorch nn.Linear shapes: W is (out, in)).
    bound_ih = 1.0 / jnp.sqrt(jnp.float32(input_size))
    bound_hh = 1.0 / jnp.sqrt(jnp.float32(hidden_size))
    w_ih = jax.random.uniform(kw1, (hidden_size, input_size),
                              minval=-bound_ih, maxval=bound_ih, dtype=jnp.float32)
    b_ih = jax.random.uniform(kb1, (hidden_size,),
                              minval=-bound_ih, maxval=bound_ih, dtype=jnp.float32)
    w_hh = jax.random.uniform(kw2, (hidden_size, hidden_size),
                              minval=-bound_hh, maxval=bound_hh, dtype=jnp.float32)
    b_hh = jax.random.uniform(kb2, (hidden_size,),
                              minval=-bound_hh, maxval=bound_hh, dtype=jnp.float32)

    # One-time parameter prep (transpose + pre-sum bias + 128-pad + bf16 cast).
    wih_t, whh_t, b_fused = prepare_rnn_params(w_ih, b_ih, w_hh, b_hh)

    out = rnn_manual_forward(x, h, wih_t, whh_t, b_fused)
    out = jax.block_until_ready(out)

    # Reference check against plain f32 JAX (same semantics as PyTorch forward).
    # Tolerance is loosened because weights/activations feed the MXU in bf16
    # (accumulation stays f32); tanh outputs are in [-1, 1].
    ref = jnp.tanh(x @ w_ih.T + b_ih + h @ w_hh.T + b_hh)
    assert out.shape == (batch, hidden_size)
    assert jnp.allclose(out, ref, atol=5e-2, rtol=0.0), float(jnp.max(jnp.abs(out - ref)))

    print("KERNEL_OK")
</pallas_src>

<mosaic_0001>
module attributes {stable_mosaic.version = 11 : i64} {
  func.func @rnn_cell_kernel(%arg0: i32, %arg1: memref<2x16xf32, #tpu.memory_space<vmem>>, %arg2: memref<2x32xf32, #tpu.memory_space<vmem>>, %arg3: memref<16x128xbf16, #tpu.memory_space<vmem>>, %arg4: memref<32x128xbf16, #tpu.memory_space<vmem>>, %arg5: memref<1x128xf32, #tpu.memory_space<vmem>>, %arg6: memref<2x128xf32, #tpu.memory_space<vmem>>) attributes {dimension_semantics = [#tpu.dimension_semantics<parallel>], iteration_bounds = array<i64: 1>, scalar_prefetch = 0 : i64, scratch_operands = 0 : i64, tpu.core_type = #tpu.core_type<tc>, window_params = [{pipeline_mode = #tpu.pipeline_mode<synchronous>, transform_indices = @transform_0, window_bounds = array<i64: 2, 16>}, {pipeline_mode = #tpu.pipeline_mode<synchronous>, transform_indices = @transform_1, window_bounds = array<i64: 2, 32>}, {transform_indices = @transform_2, window_bounds = array<i64: 16, 128>}, {transform_indices = @transform_3, window_bounds = array<i64: 32, 128>}, {transform_indices = @transform_4, window_bounds = array<i64: 1, 128>}, {transform_indices = @transform_5, window_bounds = array<i64: 2, 128>}]} {
    %c0 = arith.constant 0 : index
    %c0_0 = arith.constant 0 : index
    %0 = vector.load %arg1[%c0, %c0_0] : memref<2x16xf32, #tpu.memory_space<vmem>>, vector<2x16xf32>
    %1 = arith.truncf %0 : vector<2x16xf32> to vector<2x16xbf16>
    %c0_1 = arith.constant 0 : index
    %c0_2 = arith.constant 0 : index
    %2 = vector.load %arg2[%c0_1, %c0_2] : memref<2x32xf32, #tpu.memory_space<vmem>>, vector<2x32xf32>
    %3 = arith.truncf %2 : vector<2x32xf32> to vector<2x32xbf16>
    %c0_3 = arith.constant 0 : index
    %c0_4 = arith.constant 0 : index
    %4 = vector.load %arg3[%c0_3, %c0_4] : memref<16x128xbf16, #tpu.memory_space<vmem>>, vector<16x128xbf16>
    %cst = arith.constant dense<0.000000e+00> : vector<2x128xf32>
    %5 = tpu.matmul %1, %4, %cst {dimension_numbers = #tpu.dot_dimension_numbers<[1], [0], [0], [1], [0, 0, 1, 1], [], []>} : vector<2x16xbf16>, vector<16x128xbf16>, vector<2x128xf32> -> vector<2x128xf32>
    %c0_5 = arith.constant 0 : index
    %c0_6 = arith.constant 0 : index
    %6 = vector.load %arg4[%c0_5, %c0_6] : memref<32x128xbf16, #tpu.memory_space<vmem>>, vector<32x128xbf16>
    %cst_7 = arith.constant dense<0.000000e+00> : vector<2x128xf32>
    %7 = tpu.matmul %3, %6, %cst_7 {dimension_numbers = #tpu.dot_dimension_numbers<[1], [0], [0], [1], [0, 0, 1, 1], [], []>} : vector<2x32xbf16>, vector<32x128xbf16>, vector<2x128xf32> -> vector<2x128xf32>
    %8 = arith.addf %5, %7 : vector<2x128xf32>
    %c0_8 = arith.constant 0 : index
    %c0_9 = arith.constant 0 : index
    %9 = vector.load %arg5[%c0_8, %c0_9] : memref<1x128xf32, #tpu.memory_space<vmem>>, vector<1x128xf32>
    %10 = vector.broadcast %9 : vector<1x128xf32> to vector<2x128xf32>
    %11 = arith.addf %8, %10 : vector<2x128xf32>
    %12 = math.tanh %11 : vector<2x128xf32>
    %c0_10 = arith.constant 0 : index
    %c0_11 = arith.constant 0 : index
    %13 = vector.load %arg6[%c0_10, %c0_11] : memref<2x128xf32, #tpu.memory_space<vmem>>, vector<2x128xf32>
    tpu.vector_store %arg6[%c0_10, %c0_11], %12 {strides = array<i32>} : memref<2x128xf32, #tpu.memory_space<vmem>>, vector<2x128xf32>,
    return
  }
  func.func @transform_0(%arg0: i32) -> (i32, i32) {
    %c0_i32 = arith.constant 0 : i32
    %c0_i32_0 = arith.constant 0 : i32
    %c0_i32_1 = arith.constant 0 : i32
    return %c0_i32, %c0_i32_0 : i32, i32
  }
  func.func @transform_1(%arg0: i32) -> (i32, i32) {
    %c0_i32 = arith.constant 0 : i32
    %c0_i32_0 = arith.constant 0 : i32
    %c0_i32_1 = arith.constant 0 : i32
    return %c0_i32, %c0_i32_0 : i32, i32
  }
  func.func @transform_2(%arg0: i32) -> (i32, i32) {
    %c0_i32 = arith.constant 0 : i32
    %c0_i32_0 = arith.constant 0 : i32
    return %c0_i32, %arg0 : i32, i32
  }
  func.func @transform_3(%arg0: i32) -> (i32, i32) {
    %c0_i32 = arith.constant 0 : i32
    %c0_i32_0 = arith.constant 0 : i32
    return %c0_i32, %arg0 : i32, i32
  }
  func.func @transform_4(%arg0: i32) -> (i32, i32) {
    %c0_i32 = arith.constant 0 : i32
    %c0_i32_0 = arith.constant 0 : i32
    return %c0_i32, %arg0 : i32, i32
  }
  func.func @transform_5(%arg0: i32) -> (i32, i32) {
    %c0_i32 = arith.constant 0 : i32
    %c0_i32_0 = arith.constant 0 : i32
    return %c0_i32, %arg0 : i32, i32
  }
}

</mosaic_0001>

<llo_original>
// kernel: tpu_custom_call.1
$region0: #{tpu_custom_call.1}
  #allocation0 [shape = 'u32[]', space=smem, size = 0x4, offset = 0x4, fixed_abs, tag = 'smem constant byte address 0x4 - core index']
  #allocation1 [shape = 'u32[144,128]{1,0:T(1,128)}', space=vmem, size = 0x12000, scoped, tag = 'internal scratch']
  %s0 = inlined_call_operand.hbm [shape: f32[2,16], index: 0, kind: input, shape index: {}]
  %s1 = inlined_call_operand.vmem [shape: f32[2,32], index: 1, kind: input, shape index: {}]
  %s2 = inlined_call_operand.hbm [shape: bf16[16,128], index: 2, kind: input, shape index: {}]
  %s3 = inlined_call_operand.hbm [shape: bf16[32,128], index: 3, kind: input, shape index: {}]
  %s4 = inlined_call_operand.vmem [shape: f32[1,128], index: 4, kind: input, shape index: {}]
  %s5 = inlined_call_operand.hbm [shape: f32[2,128], index: 5, kind: output, shape index: {}]
  %s6 = sld [smem:[#allocation0]]
  $region42: #{tpu_custom_call.1} parent=0
    _
  %s8 = ssub.s32 1, %s6
  %s9 = scalar_select 0, %s8, %s6
  $region1: #{tpu_custom_call.1} parent=0
    #allocation2 [shape = 'u8[1024]{0}', space=vmem, size = 0x400, scoped, tag = 'input window, operand 0, single buffered']
    #allocation3 [shape = 's32[1]{0}', space=sflag, size = 0x4, scoped, tag = 'scoped memory for tpu_custom_call.1']
    #allocation4 [shape = 's32[1]{0}', space=sflag, size = 0x4, scoped, tag = 'scoped memory for tpu_custom_call.1']
    #allocation5 [shape = 'u8[4096]{0}', space=vmem, size = 0x1000, scoped, tag = 'input window, operand 2, single buffered']
    #allocation6 [shape = 's32[1]{0}', space=sflag, size = 0x4, scoped, tag = 'scoped memory for tpu_custom_call.1']
    #allocation7 [shape = 'u8[8192]{0}', space=vmem, size = 0x2000, scoped, tag = 'input window, operand 3, single buffered']
    #allocation8 [shape = 'u8[1024]{0}', space=vmem, size = 0x400, scoped, tag = 'output window, operand 0, single buffered']
    %10 = vsyncpa [#allocation3], 0
    %11 = vsyncpa [#allocation6], 0
    %12 = vsyncpa [#allocation4], 0
    // Predicated region
    $region2: #{tpu_custom_call.1} parent=1 // pred_check
      _
    $region3: #{tpu_custom_call.1} parent=1 // pred_check_branch
      %14 = sbr.rel (0) target = $region5
    $region4: #{tpu_custom_call.1} parent=1 // pred_region
      %s16 = ssub.s32 32, 32
      %17 = vsyncadd [#allocation3], %s16
      %s19 = sshll.u32 [#allocation2], 4
      %s20 = int_to_ptr.vmem [resolvable:$true] %s19
      %22 = dma.hbm_to_vmem [thread:$0]  %s0, 32, %s20, [#allocation3]
    $region5: #{tpu_custom_call.1} parent=1 // pred_fallthru
      _
    // Predicated region
    $region6: #{tpu_custom_call.1} parent=1 // pred_check
      _
    $region7: #{tpu_custom_call.1} parent=1 // pred_check_branch
      %24 = sbr.rel (0) target = $region9
    $region8: #{tpu_custom_call.1} parent=1 // pred_region
      _
    $region9: #{tpu_custom_call.1} parent=1 // pred_fallthru
      _
    // Predicated region
    $region10: #{tpu_custom_call.1} parent=1 // pred_check
      _
    $region11: #{tpu_custom_call.1} parent=1 // pred_check_branch
      %26 = sbr.rel (0) target = $region13
    $region12: #{tpu_custom_call.1} parent=1 // pred_region
      %s28 = ssub.s32 128, 128
      %29 = vsyncadd [#allocation6], %s28
      %s30 = sshll.u32 [#allocation5], 4
      %s31 = int_to_ptr.vmem [resolvable:$true] %s30
      %36 = dma.hbm_to_vmem [thread:$0]  %s2, 128, %s31, [#allocation6], 64, 64, 4
    $region13: #{tpu_custom_call.1} parent=1 // pred_fallthru
      _
    // Predicated region
    $region14: #{tpu_custom_call.1} parent=1 // pred_check
      _
    $region15: #{tpu_custom_call.1} parent=1 // pred_check_branch
      %38 = sbr.rel (0) target = $region17
    $region16: #{tpu_custom_call.1} parent=1 // pred_region
      %s40 = ssub.s32 256, 256
      %41 = vsyncadd [#allocation6], %s40
      %s42 = sshll.u32 [#allocation7], 4
      %s43 = int_to_ptr.vmem [resolvable:$true] %s42
      %48 = dma.hbm_to_vmem [thread:$0]  %s3, 256, %s43, [#allocation6], 64, 64, 4
    $region17: #{tpu_custom_call.1} parent=1 // pred_fallthru
      _
    // Predicated region
    $region18: #{tpu_custom_call.1} parent=1 // pred_check
      _
    $region19: #{tpu_custom_call.1} parent=1 // pred_check_branch
      %50 = sbr.rel (0) target = $region21
    $region20: #{tpu_custom_call.1} parent=1 // pred_region
      _
    $region21: #{tpu_custom_call.1} parent=1 // pred_fallthru
      _
    // Predicated region
    $region22: #{tpu_custom_call.1} parent=1 // pred_check
      _
    $region23: #{tpu_custom_call.1} parent=1 // pred_check_branch
      %52 = sbr.rel (0) target = $region25
    $region24: #{tpu_custom_call.1} parent=1 // pred_region
      %53 = dma.done [#allocation3], 32
    $region25: #{tpu_custom_call.1} parent=1 // pred_fallthru
      _
    // Predicated region
    $region26: #{tpu_custom_call.1} parent=1 // pred_check
      _
    $region27: #{tpu_custom_call.1} parent=1 // pred_check_branch
      %55 = sbr.rel (0) target = $region29
    $region28: #{tpu_custom_call.1} parent=1 // pred_region
      %56 = dma.done [#allocation6], 128
    $region29: #{tpu_custom_call.1} parent=1 // pred_fallthru
      _
    // Predicated region
    $region30: #{tpu_custom_call.1} parent=1 // pred_check
      _
    $region31: #{tpu_custom_call.1} parent=1 // pred_check_branch
      %58 = sbr.rel (0) target = $region33
    $region32: #{tpu_custom_call.1} parent=1 // pred_region
      %59 = dma.done [#allocation6], 256
    $region33: #{tpu_custom_call.1} parent=1 // pred_fallthru
      _
    %v61 = vld [vmem:[#allocation2] sm:$0x3]
    %v62 = vpack.c.bf16 %v61, %v61
    %v63 = vld [vmem:[%s1] sm:$0x3]
    %v64 = vpack.c.bf16 %v63, %v63
    %v65 = vld [vmem:[#allocation5] sm:$0xf]
    %v66 = vld [vmem:[#allocation5 + $0x4] sm:$0xf]
    %v67 = vld [vmem:[#allocation7] sm:$0xf]
    %v68 = vld [vmem:[#allocation7 + $0x4] sm:$0xf]
    %v69 = vld [vmem:[#allocation7 + $0x8] sm:$0xf]
    %v70 = vld [vmem:[#allocation7 + $0xc] sm:$0xf]
    %v75 = vunpack.c.l.b16 %v67
    %v76 = vunpack.c.l.b16 %v68
    %v77 = vunpack.c.l.b16 %v69
    %v78 = vunpack.c.l.b16 %v70
    %v79 = vpack.c.b16 %v76, %v75
    %v80 = vpack.c.b16 %v78, %v77
    %vm83 = vcmask 261120
    %v85 = vsel %vm83, %v64, 0
    %87 = vmatprep.subr.bf16.mxu0 0
    %88 = vmatpush1.bf16.msra.mxu0 %v79
    %89 = vmatprep.subr.bf16.mxu0 0
    %90 = vmatpush1.bf16.msra.mxu0 %v80
    %91 = vmatprep.subr.bf16.mxu0 0
    %92 = vmatpush1.bf16.msra.mxu0 0
    %93 = vmatprep.subr.bf16.mxu0 0
    %94 = vmatpush1.bf16.msra.mxu0 0
    %95 = vmatprep.subr.bf16.mxu0 0
    %96 = vmatpush1.bf16.msra.mxu0 0
    %97 = vmatprep.subr.bf16.mxu0 0
    %98 = vmatpush1.bf16.msra.mxu0 0
    %99 = vmatprep.subr.bf16.mxu0 0
    %100 = vmatpush1.bf16.msra.mxu0 0
    %101 = vmatprep.subr.bf16.mxu0 0
    %102 = vmatpush1.bf16.msra.mxu0 0
    %103 = vmatprep.subr.bf16.mxu0 0
    %104 = vmatpush1.bf16.msra.mxu0 0
    %105 = vmatprep.subr.bf16.mxu0 0
    %106 = vmatpush1.bf16.msra.mxu0 0
    %107 = vmatprep.subr.bf16.mxu0 0
    %108 = vmatpush1.bf16.msra.mxu0 0
    %109 = vmatprep.subr.bf16.mxu0 0
    %110 = vmatpush1.bf16.msra.mxu0 0
    %111 = vmatprep.subr.bf16.mxu0 0
    %112 = vmatpush1.bf16.msra.mxu0 0
    %113 = vmatprep.subr.bf16.mxu0 0
    %114 = vmatpush1.bf16.msra.mxu0 0
    %115 = vmatprep.subr.bf16.mxu0 0
    %116 = vmatpush1.bf16.msra.mxu0 0
    %117 = vmatprep.subr.bf16.mxu0 0
    %118 = vmatpush1.bf16.msra.mxu0 0
    %119 = vmatprep.mubr.bf16.mxu0 0
    %120 = vmatmul.mubr.bf16.gmra.mrb[0].mxu0 %v85
    %v121 = vpop.f32.mrb[0].mxu0
    %v122 = vadd.f32 0.0, %v121
    %v123 = vpop.f32.mrb[0].mxu0
    %v124 = vpop.f32.mrb[0].mxu0
    %v125 = vpop.f32.mrb[0].mxu0
    %126 = vdwg.mxu0
    %v129 = vunpack.c.l.b16 %v65
    %v130 = vunpack.c.l.b16 %v66
    %v131 = vpack.c.b16 %v130, %v129
    %vm133 = vcmask 130048
    %v135 = vsel %vm133, %v62, 0
    %137 = vmatprep.subr.bf16.mxu0 0
    %138 = vmatpush1.bf16.msra.mxu0 %v131
    %139 = vmatprep.subr.bf16.mxu0 0
    %140 = vmatpush1.bf16.msra.mxu0 0
    %141 = vmatprep.subr.bf16.mxu0 0
    %142 = vmatpush1.bf16.msra.mxu0 0
    %143 = vmatprep.subr.bf16.mxu0 0
    %144 = vmatpush1.bf16.msra.mxu0 0
    %145 = vmatprep.subr.bf16.mxu0 0
    %146 = vmatpush1.bf16.msra.mxu0 0
    %147 = vmatprep.subr.bf16.mxu0 0
    %148 = vmatpush1.bf16.msra.mxu0 0
    %149 = vmatprep.subr.bf16.mxu0 0
    %150 = vmatpush1.bf16.msra.mxu0 0
    %151 = vmatprep.subr.bf16.mxu0 0
    %152 = vmatpush1.bf16.msra.mxu0 0
    %153 = vmatprep.subr.bf16.mxu0 0
    %154 = vmatpush1.bf16.msra.mxu0 0
    %155 = vmatprep.subr.bf16.mxu0 0
    %156 = vmatpush1.bf16.msra.mxu0 0
    %157 = vmatprep.subr.bf16.mxu0 0
    %158 = vmatpush1.bf16.msra.mxu0 0
    %159 = vmatprep.subr.bf16.mxu0 0
    %160 = vmatpush1.bf16.msra.mxu0 0
    %161 = vmatprep.subr.bf16.mxu0 0
    %162 = vmatpush1.bf16.msra.mxu0 0
    %163 = vmatprep.subr.bf16.mxu0 0
    %164 = vmatpush1.bf16.msra.mxu0 0
    %165 = vmatprep.subr.bf16.mxu0 0
    %166 = vmatpush1.bf16.msra.mxu0 0
    %167 = vmatprep.subr.bf16.mxu0 0
    %168 = vmatpush1.bf16.msra.mxu0 0
    %169 = vmatprep.mubr.bf16.mxu0 0
    %170 = vmatmul.mubr.bf16.gmra.mrb[0].mxu0 %v135
    %v171 = vpop.f32.mrb[0].mxu0
    %v172 = vadd.f32 %v122, %v171
    %v173 = vpop.f32.mrb[0].mxu0
    %v174 = vpop.f32.mrb[0].mxu0
    %v175 = vpop.f32.mrb[0].mxu0
    %176 = vdwg.mxu0
    %v177 = vld [vmem:[%s4] sm:$0x1]
    %v179 = vlaneseq
    %v180 = vshrl.u32 %v179, 7
    %v181 = vsub.s32 0, %v180
    %v182 = vrot.slane %v177, %v181
    %v184 = vadd.f32 %v172, %v182
    %v185 = vtanh.pop %v184
    %186 = vst [vmem:[#allocation8] sm:$0x3] %v185
    // Predicated region
    $region34: #{tpu_custom_call.1} parent=1 // pred_check
      _
    $region35: #{tpu_custom_call.1} parent=1 // pred_check_branch
      %188 = sbr.rel (0) target = $region37
    $region36: #{tpu_custom_call.1} parent=1 // pred_region
      %s190 = ssub.s32 32, 32
      %191 = vsyncadd [#allocation4], %s190
      %s193 = sshll.u32 [#allocation8], 4
      %s194 = int_to_ptr.vmem [resolvable:$true] %s193
      %196 = dma.vmem_to_hbm [thread:$0]  %s194, 32, %s5, [#allocation4]
    $region37: #{tpu_custom_call.1} parent=1 // pred_fallthru
      _
    // Predicated region
    $region38: #{tpu_custom_call.1} parent=1 // pred_check
      _
    $region39: #{tpu_custom_call.1} parent=1 // pred_check_branch
      %198 = sbr.rel (0) target = $region41
    $region40: #{tpu_custom_call.1} parent=1 // pred_region
      %199 = dma.done [#allocation4], 32
    $region41: #{tpu_custom_call.1} parent=1 // pred_fallthru
      _
    %200 = vsyncpa [#allocation3], 1
    %201 = vsyncpa [#allocation6], 1
    %202 = vsyncpa [#allocation4], 1

</llo_original>
